<compile_context>
chip_gen: v5e
topology: v5e:2x2
jax: 0.10.0
libtpu: 0.0.40
codegen_flags: <defaults>
</compile_context>

<pallas_src>
import jax
import jax.numpy as jnp
from jax.experimental import pallas as pl
from jax.experimental.pallas import tpu as pltpu


def _round_up(x, m):
    return ((x + m - 1) // m) * m


def _align_hw(x):
    """Lane alignment: 128 for small dims, 256 once large enough that the
    extra pad is cheap (full pass occupancy on the 256x256 MXUs of v6e/v7x)."""
    if x > 256:
        return _round_up(x, 256)
    return _round_up(x, 128)


_TILE_M_CANDIDATES = (512, 256, 128, 64, 32, 16, 8)


def _pick_tile_m(m, cap):
    """Largest tile_m <= cap with <=12.5% pad waste; keep >=2 M tiles when
    possible so v7x's second TensorCore is not idle."""
    m8 = _round_up(max(m, 1), 8)
    cap = max(8, (cap // 8) * 8)
    tile = 8
    for cand in _TILE_M_CANDIDATES:
        if cand > cap:
            continue
        waste = _round_up(m8, cand) - m8
        if waste <= max(m8 // 8, 8):
            tile = cand
            break
    if _round_up(m8, tile) == tile and m8 > 8:  # single tile -> split for megacore
        half = _round_up((m8 + 1) // 2, 8)
        for cand in _TILE_M_CANDIDATES:
            if cand <= min(half, cap):
                tile = cand
                break
    return tile


def _patch_embed_matmul_kernel(x_ref, w_ref, b_ref, o_ref):
    """One output tile: (tile_m, K) @ (K, tile_n) + bias, register-accumulated."""
    acc = jnp.dot(x_ref[...], w_ref[...], preferred_element_type=jnp.float32)
    o_ref[...] = (acc + b_ref[...].astype(jnp.float32)).astype(o_ref.dtype)


def patch_embedding_forward(x_nchw, w_oihw, bias, *, patch_size, operand_dtype=None):
    """PatchEmbedding forward.

    x_nchw : (N, Cin, H, W)              PyTorch layout
    w_oihw : (num_hiddens, Cin, ph, pw)  PyTorch layout
    bias   : (num_hiddens,)
    operand_dtype : optional dtype (e.g. jnp.bfloat16) for matmul operands;
                    accumulation is always f32.
    returns: (N, num_patches, num_hiddens)
    """
    ph, pw = patch_size
    n, cin, h, w = x_nchw.shape
    cout, cin_w, kh, kw = w_oihw.shape
    assert cin == cin_w and (kh, kw) == (ph, pw)
    assert h % ph == 0 and w % pw == 0

    hp, wp = h // ph, w // pw
    num_patches = hp * wp
    k = cin * ph * pw
    m = n * num_patches
    out_dtype = x_nchw.dtype
    out_isz = jnp.dtype(out_dtype).itemsize
    op_dtype = jnp.dtype(operand_dtype) if operand_dtype is not None else jnp.dtype(x_nchw.dtype)
    op_isz = op_dtype.itemsize

    # --- wrapper-side space-to-depth (exact because stride == kernel) -------
    # (N,Cin,H,W) -> (N,Hp,Wp,Cin,ph,pw) -> (M, K); K order matches w.reshape(Cout,-1).
    patches = x_nchw.reshape(n, cin, hp, ph, wp, pw)
    patches = jnp.transpose(patches, (0, 2, 4, 1, 3, 5)).reshape(m, k)
    w_mat = jnp.transpose(w_oihw.reshape(cout, k), (1, 0))  # (K, Cout)
    if op_dtype != patches.dtype:
        patches = patches.astype(op_dtype)
        w_mat = w_mat.astype(op_dtype)
    bias_f32 = bias.astype(jnp.float32)

    k_pad = _align_hw(k)
    n_pad = _align_hw(cout)

    # Conservative VMEM budget so the same tiling is safe on v5e/v6e (128 MiB
    # physical) and v7x (64 MiB physical, 32 MiB default scoped).
    vmem_budget = 24 * 1024 * 1024
    w_resident_bytes = 2 * k_pad * n_pad * op_isz  # worst case: double-buffered

    if w_resident_bytes <= 12 * 1024 * 1024:
        # ---- Case A: full weight resident in VMEM, 1-D grid over M --------
        # Constant W/bias block index => fetched once, never re-DMA'd.
        tile_n = n_pad
        remaining = vmem_budget - w_resident_bytes - 2 * tile_n * 4
        cap_m = max(8, remaining // (2 * (k_pad * op_isz + tile_n * out_isz)))
        tile_m = _pick_tile_m(m, cap_m)
        m_pad = _round_up(_round_up(m, 8), tile_m)
        grid = (m_pad // tile_m,)
        in_specs = [
            pl.BlockSpec((tile_m, k_pad), lambda i: (i, 0)),
            pl.BlockSpec((k_pad, tile_n), lambda i: (0, 0)),  # resident weight
            pl.BlockSpec((1, tile_n), lambda i: (0, 0)),       # resident bias
        ]
        out_specs = pl.BlockSpec((tile_m, tile_n), lambda i: (i, 0))
        dim_sem = ("parallel",)
    else:
        # ---- Case B: very large Cout -> 2-D grid, N on the OUTER axis -----
        # W's block index only changes on the outer axis => DMA'd n_tiles
        # times total instead of once per M tile.
        tile_n = 512
        n_pad = _round_up(n_pad, tile_n)
        remaining = vmem_budget - 2 * k_pad * tile_n * op_isz - 2 * tile_n * 4
        cap_m = max(8, remaining // (2 * (k_pad * op_isz + tile_n * out_isz)))
        tile_m = _pick_tile_m(m, cap_m)
        m_pad = _round_up(_round_up(m, 8), tile_m)
        grid = (n_pad // tile_n, m_pad // tile_m)
        in_specs = [
            pl.BlockSpec((tile_m, k_pad), lambda j, i: (i, 0)),
            pl.BlockSpec((k_pad, tile_n), lambda j, i: (0, j)),
            pl.BlockSpec((1, tile_n), lambda j, i: (0, j)),
        ]
        out_specs = pl.BlockSpec((tile_m, tile_n), lambda j, i: (i, j))
        dim_sem = ("parallel", "parallel")

    # --- pad to the chosen tiling (no-ops when shapes already align) --------
    patches_p = patches
    if (m_pad, k_pad) != (m, k):
        patches_p = jnp.pad(patches, ((0, m_pad - m), (0, k_pad - k)))
    w_p = w_mat
    if (k_pad, n_pad) != (k, cout):
        w_p = jnp.pad(w_mat, ((0, k_pad - k), (0, n_pad - cout)))
    b_p = bias_f32 if n_pad == cout else jnp.pad(bias_f32, (0, n_pad - cout))
    b_p = b_p.reshape(1, n_pad)

    # --- VMEM limit & cost estimate derived from actual block sizes ---------
    vmem_needed = (2 * tile_m * k_pad * op_isz + 2 * k_pad * tile_n * op_isz
                   + 2 * tile_n * 4 + 2 * tile_m * tile_n * out_isz)
    vmem_limit = int(min(max(vmem_needed + (4 << 20), 32 << 20), 60 << 20))

    cost = pl.CostEstimate(
        flops=2 * m_pad * k_pad * n_pad,
        transcendentals=0,
        bytes_accessed=(m_pad * k_pad * op_isz + k_pad * n_pad * op_isz
                        + n_pad * 4 + m_pad * n_pad * out_isz),
    )

    out_p = pl.pallas_call(
        _patch_embed_matmul_kernel,
        out_shape=jax.ShapeDtypeStruct((m_pad, n_pad), out_dtype),
        grid_spec=pltpu.PrefetchScalarGridSpec(
            num_scalar_prefetch=0,
            grid=grid,
            in_specs=in_specs,
            out_specs=out_specs,
        ),
        compiler_params=pltpu.CompilerParams(
            dimension_semantics=dim_sem,
            vmem_limit_bytes=vmem_limit,
        ),
        cost_estimate=cost,
    )(patches_p, w_p, b_p)

    out = out_p if (m_pad, n_pad) == (m, cout) else out_p[:m, :cout]
    return out.reshape(n, num_patches, cout)


def _reference_patch_embedding(x, w, b, patch_size):
    conv = jax.lax.conv_general_dilated(
        x, w, window_strides=patch_size, padding="VALID",
        dimension_numbers=("NCHW", "OIHW", "NCHW"))
    conv = conv + b.reshape(1, -1, 1, 1)
    n, cout, hp, wp = conv.shape
    return jnp.transpose(conv.reshape(n, cout, hp * wp), (0, 2, 1))


if __name__ == "__main__":
    key = jax.random.PRNGKey(0)
    kx, kw, kb = jax.random.split(key, 3)

    # Shapes consistent with PatchEmbedding(img_size=(16,16), patch_size=(4,4),
    # num_hiddens=32) applied to a (2, 4, 16, 16) input.
    n, cin, h, w = 2, 4, 16, 16
    patch_size = (4, 4)
    num_hiddens = 32

    x = jax.random.normal(kx, (n, cin, h, w), dtype=jnp.float32)
    fan_in = cin * patch_size[0] * patch_size[1]
    bound = (1.0 / fan_in) ** 0.5
    weight = jax.random.uniform(
        kw, (num_hiddens, cin, patch_size[0], patch_size[1]),
        minval=-bound, maxval=bound, dtype=jnp.float32)
    bias = jax.random.uniform(
        kb, (num_hiddens,), minval=-bound, maxval=bound, dtype=jnp.float32)

    ref = _reference_patch_embedding(x, weight, bias, patch_size)

    # f32 operand path (matches PyTorch numerics within small tolerance).
    out_f32 = jax.block_until_ready(
        patch_embedding_forward(x, weight, bias, patch_size=patch_size))
    ok_f32 = (out_f32.shape == ref.shape
              and bool(jnp.allclose(out_f32, ref, atol=1e-5, rtol=1e-5)))

    # bf16 operand / f32 accumulation path (MXU-native, looser tolerance).
    out_bf16 = jax.block_until_ready(
        patch_embedding_forward(x, weight, bias, patch_size=patch_size,
                                operand_dtype=jnp.bfloat16))
    ok_bf16 = (out_bf16.shape == ref.shape
               and bool(jnp.allclose(out_bf16, ref, atol=3e-2, rtol=3e-2)))

    if ok_f32 and ok_bf16:
        print("KERNEL_OK")
    else:
        err32 = float(jnp.max(jnp.abs(out_f32 - ref)))
        err16 = float(jnp.max(jnp.abs(out_bf16 - ref)))
        print(f"MISMATCH f32_max_err={err32} bf16_max_err={err16} "
              f"shapes={out_f32.shape} vs {ref.shape}")
</pallas_src>

<mosaic_0001>
module attributes {stable_mosaic.version = 11 : i64} {
  func.func @_patch_embed_matmul_kernel(%arg0: i32, %arg1: memref<16x128xf32, #tpu.memory_space<vmem>>, %arg2: memref<128x128xf32, #tpu.memory_space<vmem>>, %arg3: memref<1x128xf32, #tpu.memory_space<vmem>>, %arg4: memref<16x128xf32, #tpu.memory_space<vmem>>) attributes {dimension_semantics = [#tpu.dimension_semantics<parallel>], iteration_bounds = array<i64: 2>, scalar_prefetch = 0 : i64, scratch_operands = 0 : i64, tpu.core_type = #tpu.core_type<tc>, window_params = [{transform_indices = @transform_0, window_bounds = array<i64: 16, 128>}, {pipeline_mode = #tpu.pipeline_mode<synchronous>, transform_indices = @transform_1, window_bounds = array<i64: 128, 128>}, {pipeline_mode = #tpu.pipeline_mode<synchronous>, transform_indices = @transform_2, window_bounds = array<i64: 1, 128>}, {transform_indices = @transform_3, window_bounds = array<i64: 16, 128>}]} {
    %c0 = arith.constant 0 : index
    %c0_0 = arith.constant 0 : index
    %0 = vector.load %arg1[%c0, %c0_0] : memref<16x128xf32, #tpu.memory_space<vmem>>, vector<16x128xf32>
    %c0_1 = arith.constant 0 : index
    %c0_2 = arith.constant 0 : index
    %1 = vector.load %arg2[%c0_1, %c0_2] : memref<128x128xf32, #tpu.memory_space<vmem>>, vector<128x128xf32>
    %cst = arith.constant dense<0.000000e+00> : vector<16x128xf32>
    %2 = tpu.matmul %0, %1, %cst {dimension_numbers = #tpu.dot_dimension_numbers<[1], [0], [0], [1], [0, 0, 1, 1], [], []>} : vector<16x128xf32>, vector<128x128xf32>, vector<16x128xf32> -> vector<16x128xf32>
    %c0_3 = arith.constant 0 : index
    %c0_4 = arith.constant 0 : index
    %3 = vector.load %arg3[%c0_3, %c0_4] : memref<1x128xf32, #tpu.memory_space<vmem>>, vector<1x128xf32>
    %4 = vector.broadcast %3 : vector<1x128xf32> to vector<16x128xf32>
    %5 = arith.addf %2, %4 : vector<16x128xf32>
    %c0_5 = arith.constant 0 : index
    %c0_6 = arith.constant 0 : index
    %6 = vector.load %arg4[%c0_5, %c0_6] : memref<16x128xf32, #tpu.memory_space<vmem>>, vector<16x128xf32>
    tpu.vector_store %arg4[%c0_5, %c0_6], %5 {strides = array<i32>} : memref<16x128xf32, #tpu.memory_space<vmem>>, vector<16x128xf32>,
    return
  }
  func.func @transform_0(%arg0: i32) -> (i32, i32) {
    %c0_i32 = arith.constant 0 : i32
    %c0_i32_0 = arith.constant 0 : i32
    return %arg0, %c0_i32 : i32, i32
  }
  func.func @transform_1(%arg0: i32) -> (i32, i32) {
    %c0_i32 = arith.constant 0 : i32
    %c0_i32_0 = arith.constant 0 : i32
    %c0_i32_1 = arith.constant 0 : i32
    return %c0_i32, %c0_i32_0 : i32, i32
  }
  func.func @transform_2(%arg0: i32) -> (i32, i32) {
    %c0_i32 = arith.constant 0 : i32
    %c0_i32_0 = arith.constant 0 : i32
    %c0_i32_1 = arith.constant 0 : i32
    return %c0_i32, %c0_i32_0 : i32, i32
  }
  func.func @transform_3(%arg0: i32) -> (i32, i32) {
    %c0_i32 = arith.constant 0 : i32
    %c0_i32_0 = arith.constant 0 : i32
    return %arg0, %c0_i32 : i32, i32
  }
}

</mosaic_0001>

<llo_original>
// kernel: tpu_custom_call.1
$region0: #{tpu_custom_call.1}
  #allocation0 [shape = 'u32[]', space=smem, size = 0x4, offset = 0x4, fixed_abs, tag = 'smem constant byte address 0x4 - core index']
  #allocation1 [shape = 'u32[72,128]{1,0:T(1,128)}', space=vmem, size = 0x9000, scoped, tag = 'internal scratch']
  %s0 = inlined_call_operand.hbm [shape: f32[32,128], index: 0, kind: input, shape index: {}]
  %s1 = inlined_call_operand.hbm [shape: f32[128,128], index: 1, kind: input, shape index: {}]
  %s2 = inlined_call_operand.vmem [shape: f32[1,128], index: 2, kind: input, shape index: {}]
  %s3 = inlined_call_operand.hbm [shape: f32[32,128], index: 3, kind: output, shape index: {}]
  %s4 = sld [smem:[#allocation0]]
  $region53: #{tpu_custom_call.1} parent=0
    _
  %s6 = ssub.s32 1, %s4
  %s7 = scalar_select 0, %s6, %s4
  $region1: #{tpu_custom_call.1} parent=0
    #allocation2 [shape = 'u8[16384]{0}', space=vmem, size = 0x4000, scoped, tag = 'input window, operand 0']
    #allocation3 [shape = 's32[2]{0}', space=sflag, size = 0x8, scoped, tag = 'scoped memory for tpu_custom_call.1']
    #allocation4 [shape = 's32[2]{0}', space=sflag, size = 0x8, scoped, tag = 'scoped memory for tpu_custom_call.1']
    #allocation5 [shape = 'u8[65536]{0}', space=vmem, size = 0x10000, scoped, tag = 'input window, operand 1, single buffered']
    #allocation6 [shape = 's32[1]{0}', space=sflag, size = 0x4, scoped, tag = 'scoped memory for tpu_custom_call.1']
    #allocation7 [shape = 'u8[16384]{0}', space=vmem, size = 0x4000, scoped, tag = 'output window, operand 0']
    %8 = vsyncpa [#allocation3], 0
    %s9 = scalar_lea.sflag [#allocation3], 1
    %10 = vsyncpa %s9, 0
    %11 = vsyncpa [#allocation6], 0
    %12 = vsyncpa [#allocation4], 0
    %s13 = scalar_lea.sflag [#allocation4], 1
    %14 = vsyncpa %s13, 0
    loop: start=0, step=1, limit=4
    $region2: #{tpu_custom_call.1} parent=1 // loop_pre_header
      _
    $region3: #{tpu_custom_call.1} parent=1 // loop_header
      %s16 = sphi 0, %s20
      %p17 = scmp.ge.s32.totalorder %s16, 4
      %s26 = sphi 0, %s28
      %s29 = sphi 0, %s26
      %s30 = sphi 0, %s29
      %s46 = sphi 0, %s30
      %s50 = sphi 0, %s50
      %s52 = sphi 0, %s50
      %s53 = sphi 0, %s52
      %s67 = sphi 0, %s53
      %s71 = sphi 0, %s71
      %s73 = sphi 0, %s71
      %s74 = sphi 0, %s73
      %s88 = sphi 0, %s74
      %s94 = sphi 0, %s96
      %s97 = sphi 0, %s94
      %s98 = sphi 0, %s97
      %s114 = sphi 0, %s98
    $region4: #{tpu_custom_call.1} parent=1 // loop_header_branch
      %19 = sbr.rel (%p17) target = $region8
    $region5: #{tpu_custom_call.1} parent=1 // loop_body
      %s21 = ssub.s32 %s16, 1
      %s22 = ssub.s32 %s16, 2
      %s23 = sadd.s32 %s16, 1
      %s24 = ssub.s32 %s16, %s23
      %p25 = scmp.eq.s32.totalorder %s24, 0
      %s27 = sadd.s32 %s26, 1
      %s28 = scalar_select %p25, %s26, %s27
      %p31 = pneg %p25
      %p32 = scmp.eq.s32.totalorder %s16, 1
      %p33 = por %p31, %p32
      %p34 = scmp.ne.s32.totalorder %s26, %s29
      %p35 = scmp.eq.s32.totalorder %s16, 0
      %p36 = por %p34, %p35
      %p37 = scmp.ne.s32.totalorder %s26, %s29
      %p38 = scmp.eq.s32.totalorder %s21, 1
      %p39 = por %p37, %p38
      %p40 = scmp.ne.s32.totalorder %s29, %s30
      %p41 = scmp.eq.s32.totalorder %s21, 0
      %p42 = por %p40, %p41
      %p43 = scmp.ne.s32.totalorder %s29, %s30
      %p44 = scmp.eq.s32.totalorder %s22, 1
      %p45 = por %p43, %p44
      %p47 = scmp.ne.s32.totalorder %s30, %s46
      %p48 = scmp.eq.s32.totalorder %s22, 0
      %p49 = por %p47, %p48
      %s51 = sadd.s32 %s50, 1
      %p54 = scmp.eq.s32.totalorder %s16, 1
      %p55 = scmp.ne.s32.totalorder %s50, %s52
      %p56 = scmp.eq.s32.totalorder %s16, 0
      %p57 = por %p55, %p56
      %p58 = scmp.ne.s32.totalorder %s50, %s52
      %p59 = scmp.eq.s32.totalorder %s21, 1
      %p60 = por %p58, %p59
      %p61 = scmp.ne.s32.totalorder %s52, %s53
      %p62 = scmp.eq.s32.totalorder %s21, 0
      %p63 = por %p61, %p62
      %p64 = scmp.ne.s32.totalorder %s52, %s53
      %p65 = scmp.eq.s32.totalorder %s22, 1
      %p66 = por %p64, %p65
      %p68 = scmp.ne.s32.totalorder %s53, %s67
      %p69 = scmp.eq.s32.totalorder %s22, 0
      %p70 = por %p68, %p69
      %s72 = sadd.s32 %s71, 1
      %p75 = scmp.eq.s32.totalorder %s16, 1
      %p76 = scmp.ne.s32.totalorder %s71, %s73
      %p77 = scmp.eq.s32.totalorder %s16, 0
      %p78 = por %p76, %p77
      %p79 = scmp.ne.s32.totalorder %s71, %s73
      %p80 = scmp.eq.s32.totalorder %s21, 1
      %p81 = por %p79, %p80
      %p82 = scmp.ne.s32.totalorder %s73, %s74
      %p83 = scmp.eq.s32.totalorder %s21, 0
      %p84 = por %p82, %p83
      %p85 = scmp.ne.s32.totalorder %s73, %s74
      %p86 = scmp.eq.s32.totalorder %s22, 1
      %p87 = por %p85, %p86
      %p89 = scmp.ne.s32.totalorder %s74, %s88
      %p90 = scmp.eq.s32.totalorder %s22, 0
      %p91 = por %p89, %p90
      %s92 = ssub.s32 %s16, %s23
      %p93 = scmp.eq.s32.totalorder %s92, 0
      %s95 = sadd.s32 %s94, 1
      %s96 = scalar_select %p93, %s94, %s95
      %p99 = pneg %p93
      %p100 = scmp.eq.s32.totalorder %s16, 1
      %p101 = por %p99, %p100
      %p102 = scmp.ne.s32.totalorder %s94, %s97
      %p103 = scmp.eq.s32.totalorder %s16, 0
      %p104 = por %p102, %p103
      %p105 = scmp.ne.s32.totalorder %s94, %s97
      %p106 = scmp.eq.s32.totalorder %s21, 1
      %p107 = por %p105, %p106
      %p108 = scmp.ne.s32.totalorder %s97, %s98
      %p109 = scmp.eq.s32.totalorder %s21, 0
      %p110 = por %p108, %p109
      %p111 = scmp.ne.s32.totalorder %s97, %s98
      %p112 = scmp.eq.s32.totalorder %s22, 1
      %p113 = por %p111, %p112
      %p115 = scmp.ne.s32.totalorder %s98, %s114
      %p116 = scmp.eq.s32.totalorder %s22, 0
      %p117 = por %p115, %p116
      %p118 = scmp.le.s32.totalorder 1, %s16
      %p119 = scmp.lt.s32.totalorder %s16, 3
      %p120 = pnand %p118, %p119
      %p121 = pneg %p120
      // Predicated region
      $region9: #{tpu_custom_call.1} parent=5 // pred_check
        _
      $region10: #{tpu_custom_call.1} parent=5 // pred_check_branch
        %123 = sbr.rel (%p120) target = $region12
      $region11: #{tpu_custom_call.1} parent=5 // pred_region
        %s124 = ssub.s32 %s16, 1
        // Predicated region
        $region13: #{tpu_custom_call.1} parent=11 // pred_check
          %p125 = pneg %p63
        $region14: #{tpu_custom_call.1} parent=11 // pred_check_branch
          %127 = sbr.rel (%p125) target = $region16
        $region15: #{tpu_custom_call.1} parent=11 // pred_region
          %129 = vsyncadd [#allocation6], 0
          %s130 = sshll.u32 %s1, 4
          %s131 = int_to_ptr.hbm [resolvable:$true] %s130
          %s132 = sshll.u32 [#allocation5], 4
          %s133 = int_to_ptr.vmem [resolvable:$true] %s132
          %138 = dma.hbm_to_vmem [thread:$0]  %s131, 2048, %s133, [#allocation6], 128, 128, 8
        $region16: #{tpu_custom_call.1} parent=11 // pred_fallthru
          _
        // Predicated region
        $region17: #{tpu_custom_call.1} parent=11 // pred_check
          %p139 = pneg %p84
        $region18: #{tpu_custom_call.1} parent=11 // pred_check_branch
          %141 = sbr.rel (%p139) target = $region20
        $region19: #{tpu_custom_call.1} parent=11 // pred_region
          _
        $region20: #{tpu_custom_call.1} parent=11 // pred_fallthru
          _
      $region12: #{tpu_custom_call.1} parent=5 // pred_fallthru
        _
      %p142 = scmp.lt.s32.totalorder %s16, 2
      // Predicated region
      $region21: #{tpu_custom_call.1} parent=5 // pred_check
        %p143 = pneg %p142
      $region22: #{tpu_custom_call.1} parent=5 // pred_check_branch
        %145 = sbr.rel (%p143) target = $region24
      $region23: #{tpu_custom_call.1} parent=5 // pred_region
        // Predicated region
        $region25: #{tpu_custom_call.1} parent=23 // pred_check
          %p146 = pneg %p36
        $region26: #{tpu_custom_call.1} parent=23 // pred_check_branch
          %148 = sbr.rel (%p146) target = $region28
        $region27: #{tpu_custom_call.1} parent=23 // pred_region
          %s149 = sand.u32 %s26, 1
          %s150 = scalar_lea.sflag [#allocation3], %s149
          %s151 = sand.u32 %s26, 1
          %s152 = smul.addr %s151, 16
          %s153 = scalar_lea.vmem [#allocation2], %s152
          %s154 = smul.u32 2, %s16
          %156 = vsyncadd %s150, 0
          %s157 = smul.addr %s154, 8
          %s158 = scalar_lea.hbm %s0, %s157
          %s159 = sshll.u32 %s158, 4
          %s160 = int_to_ptr.hbm [resolvable:$true] %s159
          %s161 = sshll.u32 %s153, 4
          %s162 = int_to_ptr.vmem [resolvable:$true] %s161
          %167 = dma.hbm_to_vmem [thread:$0]  %s160, 256, %s162, %s150, 128, 128, 8
        $region28: #{tpu_custom_call.1} parent=23 // pred_fallthru
          _
      $region24: #{tpu_custom_call.1} parent=5 // pred_fallthru
        _
      %p168 = scmp.le.s32.totalorder 1, %s16
      %p169 = scmp.lt.s32.totalorder %s16, 3
      %p170 = pnand %p168, %p169
      %p171 = pneg %p170
      // Predicated region
      $region29: #{tpu_custom_call.1} parent=5 // pred_check
        _
      $region30: #{tpu_custom_call.1} parent=5 // pred_check_branch
        %173 = sbr.rel (%p170) target = $region32
      $region31: #{tpu_custom_call.1} parent=5 // pred_region
        %s174 = ssub.s32 %s16, 1
        %s175 = sand.u32 %s29, 1
        %s176 = scalar_lea.sflag [#allocation3], %s175
        %s177 = sand.u32 %s29, 1
        %s178 = smul.addr %s177, 16
        %s179 = scalar_lea.vmem [#allocation2], %s178
        // Predicated region
        $region33: #{tpu_custom_call.1} parent=31 // pred_check
          %p180 = pneg %p42
        $region34: #{tpu_custom_call.1} parent=31 // pred_check_branch
          %182 = sbr.rel (%p180) target = $region36
        $region35: #{tpu_custom_call.1} parent=31 // pred_region
          %184 = dma.done %s176, 256
        $region36: #{tpu_custom_call.1} parent=31 // pred_fallthru
          _
        // Predicated region
        $region37: #{tpu_custom_call.1} parent=31 // pred_check
          %p185 = pneg %p63
        $region38: #{tpu_custom_call.1} parent=31 // pred_check_branch
          %187 = sbr.rel (%p185) target = $region40
        $region39: #{tpu_custom_call.1} parent=31 // pred_region
          %189 = dma.done [#allocation6], 2048
        $region40: #{tpu_custom_call.1} parent=31 // pred_fallthru
          _
        %s190 = sand.u32 %s29, 1
        %s191 = scalar_lea.sflag [#allocation3], %s190
        %s192 = sand.u32 %s29, 1
        %s193 = smul.addr %s192, 16
        %s194 = scalar_lea.vmem [#allocation2], %s193
        %p195 = pneg %p42
        %p196 = pneg %p39
        %p197 = pneg %p63
        %p198 = pneg %p60
        %p199 = pneg %p84
        %p200 = pneg %p81
        %p201 = pneg %p110
        %p202 = pneg %p107
        %s203 = sand.u32 %s97, 1
        %s204 = scalar_lea.sflag [#allocation4], %s203
        %s205 = sand.u32 %s97, 1
        %s206 = smul.addr %s205, 16
        %s207 = scalar_lea.vmem [#allocation7], %s206
        %s208 = smul.u32 2, %s21
        %s209 = smul.u32 2, %s21
        %v210 = vld [vmem:[%s179] sm:$0xff]
        %v211 = vld [vmem:[%s179 + $0x8] sm:$0xff]
        %v212 = vld [vmem:[#allocation5] sm:$0xff]
        %v213 = vld [vmem:[#allocation5 + $0x8] sm:$0xff]
        %v214 = vld [vmem:[#allocation5 + $0x10] sm:$0xff]
        %v215 = vld [vmem:[#allocation5 + $0x18] sm:$0xff]
        %v216 = vld [vmem:[#allocation5 + $0x20] sm:$0xff]
        %v217 = vld [vmem:[#allocation5 + $0x28] sm:$0xff]
        %v218 = vld [vmem:[#allocation5 + $0x30] sm:$0xff]
        %v219 = vld [vmem:[#allocation5 + $0x38] sm:$0xff]
        %v220 = vld [vmem:[#allocation5 + $0x40] sm:$0xff]
        %v221 = vld [vmem:[#allocation5 + $0x48] sm:$0xff]
        %v222 = vld [vmem:[#allocation5 + $0x50] sm:$0xff]
        %v223 = vld [vmem:[#allocation5 + $0x58] sm:$0xff]
        %v224 = vld [vmem:[#allocation5 + $0x60] sm:$0xff]
        %v225 = vld [vmem:[#allocation5 + $0x68] sm:$0xff]
        %v226 = vld [vmem:[#allocation5 + $0x70] sm:$0xff]
        %v227 = vld [vmem:[#allocation5 + $0x78] sm:$0xff]
        %v228 = vld [vmem:[%s2] sm:$0x1]
        %v230 = vperm.slane %v228, 0
        %232 = vmatpush.msra.mxu0 %v227
        %233 = vmatpush.msra.mxu0 %v226
        %234 = vmatpush.msra.mxu0 %v225
        %235 = vmatpush.msra.mxu0 %v224
        %236 = vmatpush.msra.mxu0 %v223
        %237 = vmatpush.msra.mxu0 %v222
        %238 = vmatpush.msra.mxu0 %v221
        %239 = vmatpush.msra.mxu0 %v220
        %240 = vmatpush.msra.mxu0 %v219
        %241 = vmatpush.msra.mxu0 %v218
        %242 = vmatpush.msra.mxu0 %v217
        %243 = vmatpush.msra.mxu0 %v216
        %244 = vmatpush.msra.mxu0 %v215
        %245 = vmatpush.msra.mxu0 %v214
        %246 = vmatpush.msra.mxu0 %v213
        %247 = vmatpush.msra.mxu0 %v212
        %248 = vmatmul.f32.gmra.mxu0 %v210
        %v249 = vpop.f32.mrf.mxu0
        %v250 = vadd.f32 %v230, %v249
        %251 = vmatmul.f32.gmra.mxu0 %v211
        %v252 = vpop.f32.mrf.mxu0
        %v253 = vadd.f32 %v230, %v252
        %254 = vdwg.mxu0
        %255 = vst [vmem:[%s207] sm:$0xff] %v250
        %256 = vst [vmem:[%s207 + $0x8] sm:$0xff] %v253
        %s257 = sand.u32 %s97, 1
        %s258 = scalar_lea.sflag [#allocation4], %s257
        %s259 = sand.u32 %s97, 1
        %s260 = smul.addr %s259, 16
        %s261 = scalar_lea.vmem [#allocation7], %s260
        // Predicated region
        $region41: #{tpu_custom_call.1} parent=31 // pred_check
          %p262 = pneg %p107
        $region42: #{tpu_custom_call.1} parent=31 // pred_check_branch
          %264 = sbr.rel (%p262) target = $region44
        $region43: #{tpu_custom_call.1} parent=31 // pred_region
          %s265 = smul.u32 2, %s21
          %267 = vsyncadd %s258, 0
          %s268 = smul.addr %s265, 8
          %s269 = scalar_lea.hbm %s3, %s268
          %s270 = sshll.u32 %s261, 4
          %s271 = int_to_ptr.vmem [resolvable:$true] %s270
          %s272 = sshll.u32 %s269, 4
          %s273 = int_to_ptr.hbm [resolvable:$true] %s272
          %278 = dma.vmem_to_hbm [thread:$0]  %s271, 256, %s273, %s258, 128, 128, 8
        $region44: #{tpu_custom_call.1} parent=31 // pred_fallthru
          _
      $region32: #{tpu_custom_call.1} parent=5 // pred_fallthru
        _
      %p279 = scmp.le.s32.totalorder 2, %s16
      // Predicated region
      $region45: #{tpu_custom_call.1} parent=5 // pred_check
        %p280 = pneg %p279
      $region46: #{tpu_custom_call.1} parent=5 // pred_check_branch
        %282 = sbr.rel (%p280) target = $region48
      $region47: #{tpu_custom_call.1} parent=5 // pred_region
        %s283 = ssub.s32 %s16, 2
        // Predicated region
        $region49: #{tpu_custom_call.1} parent=47 // pred_check
          %p284 = pneg %p113
        $region50: #{tpu_custom_call.1} parent=47 // pred_check_branch
          %286 = sbr.rel (%p284) target = $region52
        $region51: #{tpu_custom_call.1} parent=47 // pred_region
          %s287 = sand.u32 %s98, 1
          %s288 = scalar_lea.sflag [#allocation4], %s287
          %s289 = sand.u32 %s98, 1
          %s290 = smul.addr %s289, 16
          %s291 = scalar_lea.vmem [#allocation7], %s290
          %293 = dma.done %s288, 256
        $region52: #{tpu_custom_call.1} parent=47 // pred_fallthru
          _
      $region48: #{tpu_custom_call.1} parent=5 // pred_fallthru
        _
    $region6: #{tpu_custom_call.1} parent=1 // loop_footer
      %s20 = sadd.s32 1, %s16
    $region7: #{tpu_custom_call.1} parent=1 // loop_footer_branch
      %15 = sbr.rel target = $region3
    $region8: #{tpu_custom_call.1} parent=1 // loop_exit
      _
    %294 = vsyncpa [#allocation3], 1
    %s295 = scalar_lea.sflag [#allocation3], 1
    %296 = vsyncpa %s295, 1
    %297 = vsyncpa [#allocation6], 1
    %298 = vsyncpa [#allocation4], 1
    %s299 = scalar_lea.sflag [#allocation4], 1
    %300 = vsyncpa %s299, 1

</llo_original>
